<compile_context>
chip_gen: v7x
topology: tpu7x:2x2x1
jax: 0.10.0
libtpu: 0.0.40
codegen_flags: <defaults>
</compile_context>

<pallas_src>
import jax
import jax.numpy as jnp
from jax.experimental import pallas as pl
from jax.experimental.pallas import tpu as pltpu


def _round_up(x, m):
    return (x + m - 1) // m * m


def _choose_tiling(n):
    """Pick (lane, padded_rows, block_rows) for a flat array of n f32 elems."""
    lane = 512 if n >= 4096 else 128          # lane-dense last dim (mult of 128)
    rows = -(-n // lane)                      # ceil-div
    block_rows = min(1024, _round_up(rows, 8))  # <= 1024x512x4B = 2 MiB / block
    rows_padded = _round_up(rows, block_rows)
    return lane, rows_padded, block_rows


# ----------------------- TPU path: in-kernel hardware PRNG -----------------------
def _tpu_rand_kernel(seed_ref, gauss_ref, x_ref, o_ref):
    # Per-tile seed: every grid step draws an independent noise stream.
    pltpu.prng_seed(seed_ref[0] + pl.program_id(0))
    shape = x_ref.shape

    def unit12():
        # uniform in [1, 2): random 23-bit mantissa, exponent forced to 127
        bits = pltpu.bitcast(pltpu.prng_random_bits(shape), jnp.uint32)
        return pltpu.bitcast((bits >> 9) | jnp.uint32(0x3F800000), jnp.float32)

    u_a = unit12()            # torch.rand_like(x1)            (= u_a - 1)
    u_b = unit12()            # torch.rand_like(x1)            (= u_b - 1)
    l2 = unit12()             # torch.rand_like(x1, f64)       (= l2  - 1)
    # TODO(synk): PyTorch promotes via float64 l2; TPU has no f64 -> kept in f32.

    # sin((u_a-1) - g) + (u_b-1) + (l2-1) - x
    #   == sin(u_a - (g+1)) + (u_b + l2) - (x + 2)   (folds the three -1.0 consts)
    g1 = gauss_ref[0] + jnp.float32(1.0)              # scalar torch.randn() + 1
    o_ref[...] = jnp.sin(u_a - g1) + (u_b + l2) - (x_ref[...] + jnp.float32(2.0))


def _forward_tpu(x2d, seed, gauss, block_rows, lane):
    rows = x2d.shape[0]
    blk = pl.BlockSpec((block_rows, lane), lambda i: (i, 0))
    return pl.pallas_call(
        _tpu_rand_kernel,
        out_shape=jax.ShapeDtypeStruct(x2d.shape, jnp.float32),
        grid=(rows // block_rows,),
        in_specs=[
            pl.BlockSpec(memory_space=pltpu.SMEM),    # seed  (1,) int32
            pl.BlockSpec(memory_space=pltpu.SMEM),    # gauss (1,) float32
            blk,                                      # x tile
        ],
        out_specs=blk,
        input_output_aliases={2: 0},                  # write result in place of x
        compiler_params=pltpu.CompilerParams(
            dimension_semantics=("parallel",)),       # shard tiles across TCs (v7x)
    )(seed, gauss, x2d)


# -------- portable path (CPU / interpret): noise precomputed in the wrapper --------
def _elem_kernel(ua_ref, ub_ref, l2_ref, x_ref, o_ref):
    o_ref[...] = jnp.sin(ua_ref[...]) + ub_ref[...] + l2_ref[...] - x_ref[...]


def _forward_portable(x2d, key, block_rows, lane):
    rows = x2d.shape[0]
    k1, k2, k3, k4 = jax.random.split(key, 4)
    g = jax.random.normal(k4, (), dtype=jnp.float32)          # torch.randn()
    ua = jax.random.uniform(k1, x2d.shape, dtype=jnp.float32) - g
    ub = jax.random.uniform(k2, x2d.shape, dtype=jnp.float32)
    l2 = jax.random.uniform(k3, x2d.shape, dtype=jnp.float32)
    blk = pl.BlockSpec((block_rows, lane), lambda i: (i, 0))
    return pl.pallas_call(
        _elem_kernel,
        out_shape=jax.ShapeDtypeStruct(x2d.shape, jnp.float32),
        grid=(rows // block_rows,),
        in_specs=[blk, blk, blk, blk],
        out_specs=blk,
    )(ua, ub, l2, x2d)


def model_forward(x1, key):
    """x1: any-shape float32 (e.g. NCHW).  Returns same shape, float32."""
    orig_shape = x1.shape
    x_flat = x1.reshape(-1).astype(jnp.float32)
    n = x_flat.shape[0]

    lane, rows, block_rows = _choose_tiling(n)
    padded = rows * lane
    if padded != n:
        x_flat = jnp.pad(x_flat, (0, padded - n))
    x2d = x_flat.reshape(rows, lane)

    if jax.default_backend() == "tpu":
        k_seed, k_gauss = jax.random.split(key)
        seed = jax.random.randint(k_seed, (1,), 0, 2**31 - 1, dtype=jnp.int32)
        gauss = jax.random.normal(k_gauss, (1,), dtype=jnp.float32)
        out2d = _forward_tpu(x2d, seed, gauss, block_rows, lane)
    else:
        # CPU / interpreter fallback: TPU PRNG primitives have no CPU lowering.
        out2d = _forward_portable(x2d, key, block_rows, lane)

    return out2d.reshape(-1)[:n].reshape(orig_shape)


if __name__ == "__main__":
    key = jax.random.PRNGKey(0)
    kx, kfwd = jax.random.split(key)
    x1 = jax.random.normal(kx, (2, 4, 16, 16), dtype=jnp.float32)

    out = model_forward(x1, kfwd)
    jax.block_until_ready(out)

    assert out.shape == x1.shape and out.dtype == jnp.float32
    assert bool(jnp.all(jnp.isfinite(out)))
    print("KERNEL_OK")
</pallas_src>

<mosaic_0001>
module attributes {stable_mosaic.version = 11 : i64} {
  func.func @_elem_kernel(%arg0: i32, %arg1: memref<16x128xf32, #tpu.memory_space<vmem>>, %arg2: memref<16x128xf32, #tpu.memory_space<vmem>>, %arg3: memref<16x128xf32, #tpu.memory_space<vmem>>, %arg4: memref<16x128xf32, #tpu.memory_space<vmem>>, %arg5: memref<16x128xf32, #tpu.memory_space<vmem>>) attributes {dimension_semantics = [#tpu.dimension_semantics<arbitrary>], iteration_bounds = array<i64: 1>, scalar_prefetch = 0 : i64, scratch_operands = 0 : i64, tpu.core_type = #tpu.core_type<tc>, window_params = [{transform_indices = @transform_0, window_bounds = array<i64: 16, 128>}, {transform_indices = @transform_1, window_bounds = array<i64: 16, 128>}, {transform_indices = @transform_2, window_bounds = array<i64: 16, 128>}, {transform_indices = @transform_3, window_bounds = array<i64: 16, 128>}, {transform_indices = @transform_4, window_bounds = array<i64: 16, 128>}]} {
    %c0 = arith.constant 0 : index
    %c0_0 = arith.constant 0 : index
    %0 = vector.load %arg1[%c0, %c0_0] : memref<16x128xf32, #tpu.memory_space<vmem>>, vector<16x128xf32>
    %1 = math.sin %0 : vector<16x128xf32>
    %c0_1 = arith.constant 0 : index
    %c0_2 = arith.constant 0 : index
    %2 = vector.load %arg2[%c0_1, %c0_2] : memref<16x128xf32, #tpu.memory_space<vmem>>, vector<16x128xf32>
    %3 = arith.addf %1, %2 : vector<16x128xf32>
    %c0_3 = arith.constant 0 : index
    %c0_4 = arith.constant 0 : index
    %4 = vector.load %arg3[%c0_3, %c0_4] : memref<16x128xf32, #tpu.memory_space<vmem>>, vector<16x128xf32>
    %5 = arith.addf %3, %4 : vector<16x128xf32>
    %c0_5 = arith.constant 0 : index
    %c0_6 = arith.constant 0 : index
    %6 = vector.load %arg4[%c0_5, %c0_6] : memref<16x128xf32, #tpu.memory_space<vmem>>, vector<16x128xf32>
    %7 = arith.subf %5, %6 : vector<16x128xf32>
    %c0_7 = arith.constant 0 : index
    %c0_8 = arith.constant 0 : index
    %8 = vector.load %arg5[%c0_7, %c0_8] : memref<16x128xf32, #tpu.memory_space<vmem>>, vector<16x128xf32>
    tpu.vector_store %arg5[%c0_7, %c0_8], %7 {strides = array<i32>} : memref<16x128xf32, #tpu.memory_space<vmem>>, vector<16x128xf32>,
    return
  }
  func.func @transform_0(%arg0: i32) -> (i32, i32) {
    %c0_i32 = arith.constant 0 : i32
    %c0_i32_0 = arith.constant 0 : i32
    return %arg0, %c0_i32 : i32, i32
  }
  func.func @transform_1(%arg0: i32) -> (i32, i32) {
    %c0_i32 = arith.constant 0 : i32
    %c0_i32_0 = arith.constant 0 : i32
    return %arg0, %c0_i32 : i32, i32
  }
  func.func @transform_2(%arg0: i32) -> (i32, i32) {
    %c0_i32 = arith.constant 0 : i32
    %c0_i32_0 = arith.constant 0 : i32
    return %arg0, %c0_i32 : i32, i32
  }
  func.func @transform_3(%arg0: i32) -> (i32, i32) {
    %c0_i32 = arith.constant 0 : i32
    %c0_i32_0 = arith.constant 0 : i32
    return %arg0, %c0_i32 : i32, i32
  }
  func.func @transform_4(%arg0: i32) -> (i32, i32) {
    %c0_i32 = arith.constant 0 : i32
    %c0_i32_0 = arith.constant 0 : i32
    return %arg0, %c0_i32 : i32, i32
  }
}

</mosaic_0001>

<llo_original>
// kernel: tpu_custom_call.1
$region0: #{tpu_custom_call.1}
  #allocation0 [shape = 'u32[]', space=smem, size = 0x4, offset = 0x4, fixed_abs, tag = 'smem constant byte address 0x4 - core index']
  #allocation1 [shape = 'u32[144,128]{1,0:T(1,128)}', space=vmem, size = 0x12000, scoped, tag = 'internal scratch']
  %s0 = inlined_call_operand.hbm [shape: f32[16,128], index: 0, kind: input, shape index: {}]
  %s1 = inlined_call_operand.hbm [shape: f32[16,128], index: 1, kind: input, shape index: {}]
  %s2 = inlined_call_operand.hbm [shape: f32[16,128], index: 2, kind: input, shape index: {}]
  %s3 = inlined_call_operand.hbm [shape: f32[16,128], index: 3, kind: input, shape index: {}]
  %s4 = inlined_call_operand.hbm [shape: f32[16,128], index: 4, kind: output, shape index: {}]
  %s5 = sld [smem:[#allocation0]]
  $region42: #{tpu_custom_call.1} parent=0
    _
  %s7 = ssub.s32 1, %s5
  %s8 = scalar_select 0, %s7, %s5
  $region1: #{tpu_custom_call.1} parent=0
    #allocation2 [shape = 'u8[8192]{0}', space=vmem, size = 0x2000, scoped, tag = 'input window, operand 0, single buffered']
    #allocation3 [shape = 's32[1]{0}', space=sflag, size = 0x4, scoped, tag = 'scoped memory for tpu_custom_call.1']
    #allocation4 [shape = 's32[1]{0}', space=sflag, size = 0x4, scoped, tag = 'scoped memory for tpu_custom_call.1']
    #allocation5 [shape = 'u8[8192]{0}', space=vmem, size = 0x2000, scoped, tag = 'input window, operand 1, single buffered']
    #allocation6 [shape = 's32[1]{0}', space=sflag, size = 0x4, scoped, tag = 'scoped memory for tpu_custom_call.1']
    #allocation7 [shape = 'u8[8192]{0}', space=vmem, size = 0x2000, scoped, tag = 'input window, operand 2, single buffered']
    #allocation8 [shape = 'u8[8192]{0}', space=vmem, size = 0x2000, scoped, tag = 'input window, operand 3, single buffered']
    #allocation9 [shape = 's32[1]{0}', space=sflag, size = 0x4, scoped, tag = 'scoped memory for tpu_custom_call.1']
    #allocation10 [shape = 'u8[8192]{0}', space=vmem, size = 0x2000, scoped, tag = 'output window, operand 0, single buffered']
    %9 = vsyncpa [#allocation3], 0
    %10 = vsyncpa [#allocation6], 0
    %11 = vsyncpa [#allocation9], 0
    %12 = vsyncpa [#allocation4], 0
    // Predicated region
    $region2: #{tpu_custom_call.1} parent=1 // pred_check
      _
    $region3: #{tpu_custom_call.1} parent=1 // pred_check_branch
      %14 = sbr.rel (0) target = $region5
    $region4: #{tpu_custom_call.1} parent=1 // pred_region
      %s16 = ssub.s32 256, 256
      %17 = vsyncadd [#allocation3], %s16
      %s18 = sshll.u32 [#allocation2], 4
      %s19 = int_to_ptr.vmem [resolvable:$true] %s18
      %24 = dma.hbm_to_vmem [thread:$0]  %s0, 256, %s19, [#allocation3], 128, 128, 8
    $region5: #{tpu_custom_call.1} parent=1 // pred_fallthru
      _
    // Predicated region
    $region6: #{tpu_custom_call.1} parent=1 // pred_check
      _
    $region7: #{tpu_custom_call.1} parent=1 // pred_check_branch
      %26 = sbr.rel (0) target = $region9
    $region8: #{tpu_custom_call.1} parent=1 // pred_region
      %s28 = ssub.s32 256, 256
      %29 = vsyncadd [#allocation6], %s28
      %s30 = sshll.u32 [#allocation5], 4
      %s31 = int_to_ptr.vmem [resolvable:$true] %s30
      %36 = dma.hbm_to_vmem [thread:$0]  %s1, 256, %s31, [#allocation6], 128, 128, 8
    $region9: #{tpu_custom_call.1} parent=1 // pred_fallthru
      _
    // Predicated region
    $region10: #{tpu_custom_call.1} parent=1 // pred_check
      _
    $region11: #{tpu_custom_call.1} parent=1 // pred_check_branch
      %38 = sbr.rel (0) target = $region13
    $region12: #{tpu_custom_call.1} parent=1 // pred_region
      %s40 = ssub.s32 256, 256
      %41 = vsyncadd [#allocation6], %s40
      %s42 = sshll.u32 [#allocation7], 4
      %s43 = int_to_ptr.vmem [resolvable:$true] %s42
      %48 = dma.hbm_to_vmem [thread:$0]  %s2, 256, %s43, [#allocation6], 128, 128, 8
    $region13: #{tpu_custom_call.1} parent=1 // pred_fallthru
      _
    // Predicated region
    $region14: #{tpu_custom_call.1} parent=1 // pred_check
      _
    $region15: #{tpu_custom_call.1} parent=1 // pred_check_branch
      %50 = sbr.rel (0) target = $region17
    $region16: #{tpu_custom_call.1} parent=1 // pred_region
      %s52 = ssub.s32 256, 256
      %53 = vsyncadd [#allocation9], %s52
      %s54 = sshll.u32 [#allocation8], 4
      %s55 = int_to_ptr.vmem [resolvable:$true] %s54
      %60 = dma.hbm_to_vmem [thread:$0]  %s3, 256, %s55, [#allocation9], 128, 128, 8
    $region17: #{tpu_custom_call.1} parent=1 // pred_fallthru
      _
    // Predicated region
    $region18: #{tpu_custom_call.1} parent=1 // pred_check
      _
    $region19: #{tpu_custom_call.1} parent=1 // pred_check_branch
      %62 = sbr.rel (0) target = $region21
    $region20: #{tpu_custom_call.1} parent=1 // pred_region
      %63 = dma.done [#allocation3], 256
    $region21: #{tpu_custom_call.1} parent=1 // pred_fallthru
      _
    // Predicated region
    $region22: #{tpu_custom_call.1} parent=1 // pred_check
      _
    $region23: #{tpu_custom_call.1} parent=1 // pred_check_branch
      %65 = sbr.rel (0) target = $region25
    $region24: #{tpu_custom_call.1} parent=1 // pred_region
      %66 = dma.done [#allocation6], 256
    $region25: #{tpu_custom_call.1} parent=1 // pred_fallthru
      _
    // Predicated region
    $region26: #{tpu_custom_call.1} parent=1 // pred_check
      _
    $region27: #{tpu_custom_call.1} parent=1 // pred_check_branch
      %68 = sbr.rel (0) target = $region29
    $region28: #{tpu_custom_call.1} parent=1 // pred_region
      %69 = dma.done [#allocation6], 256
    $region29: #{tpu_custom_call.1} parent=1 // pred_fallthru
      _
    // Predicated region
    $region30: #{tpu_custom_call.1} parent=1 // pred_check
      _
    $region31: #{tpu_custom_call.1} parent=1 // pred_check_branch
      %71 = sbr.rel (0) target = $region33
    $region32: #{tpu_custom_call.1} parent=1 // pred_region
      %72 = dma.done [#allocation9], 256
    $region33: #{tpu_custom_call.1} parent=1 // pred_fallthru
      _
    %v73 = vld [vmem:[#allocation2] sm:$0xff]
    %v74 = vld [vmem:[#allocation2 + $0x8] sm:$0xff]
    %v75 = vand.u32 2147483647, %v73
    %vm76 = vcmp.le.f32.partialorder %v75, 0.7853982
    %vm77 = vcmp.lt.s32.totalorder %v73, 0
    %v78 = vand.u32 %v73, 2139095040
    %v79 = vshrl.u32 %v78, 23
    %v80 = vsub.s32 %v79, 127
    %v81 = vand.u32 2147483647, %v73
    %v82 = vand.u32 %v81, 8388607
    %v83 = vor.u32 %v82, 8388608
    %v84 = vsub.s32 0, %v83
    %v85 = vadd.s32 %v80, 1
    %vm86 = vcmp.gt.s32.totalorder %v85, 0
    %v87 = vsel %vm86, %v85, 0
    %v88 = vshrl.u32 %v87, 5
    %v89 = vand.u32 %v87, 31
    %v90 = vsub.s32 32, %v89
    %v91 = vshrl.u32 683565275, %v90
    %v92 = vshll.u32 683565275, %v89
    %v93 = vshrl.u32 2475754826, %v90
    %v94 = vor.u32 %v92, %v93
    %v95 = vshll.u32 2475754826, %v89
    %v96 = vshrl.u32 2131351028, %v90
    %v97 = vor.u32 %v95, %v96
    %v98 = vshll.u32 2131351028, %v89
    %v99 = vshrl.u32 2102212464, %v90
    %v100 = vor.u32 %v98, %v99
    %v101 = vshll.u32 2102212464, %v89
    %v102 = vshrl.u32 920167782, %v90
    %v103 = vor.u32 %v101, %v102
    %v104 = vshll.u32 920167782, %v89
    %v105 = vshrl.u32 1326507024, %v90
    %v106 = vor.u32 %v104, %v105
    %vm107 = vcmp.lt.s32.totalorder %v88, 1
    %vm108 = vcmp.lt.s32.totalorder %v88, 2
    %vm109 = vcmp.lt.s32.totalorder %v88, 3
    %vm110 = vcmp.lt.s32.totalorder %v88, 4
    %v111 = vsel %vm107, %v91, %v94
    %v112 = vsel %vm110, %v100, 2102212464
    %v113 = vsel %vm109, %v97, %v112
    %v114 = vsel %vm108, %v111, %v113
    %v115 = vsel %vm107, %v94, %v97
    %v116 = vsel %vm110, %v103, 920167782
    %v117 = vsel %vm109, %v100, %v116
    %v118 = vsel %vm108, %v115, %v117
    %v119 = vsel %vm107, %v97, %v100
    %v120 = vsel %vm110, %v106, 1326507024
    %v121 = vsel %vm109, %v103, %v120
    %v122 = vsel %vm108, %v119, %v121
    %v123 = vshll.u32 %v83, 8
    %v124 = vmul.u32.u64.compose %v123, %v122
    %v125 = vextract.low.u32 %v124
    %v126 = vextract.high.u32 %v124
    %v127 = vmul.u32.u64.compose %v123, %v118
    %v128 = vextract.low.u32 %v127
    %v129 = vextract.high.u32 %v127
    %v130 = vmul.u32 %v123, %v114
    %v131 = vadd.s32 %v126, %v128
    %vm132 = vc.u32 %v126, %v128
    %v133 = vadd.s32 %v129, 1
    %v134 = vsel %vm132, %v133, %v129
    %v135 = vadd.s32 %v130, %v134
    %v136 = vadd.s32 %v135, 536870912
    %v137 = vshrl.u32 %v136, 30
    %v138 = vshll.u32 %v137, 30
    %v139 = vsub.s32 %v135, %v138
    %vm140 = vcmp.lt.s32.totalorder %v139, 0
    %v141 = vsub.s32 0, %v139
    %v142 = vsel %vm140, %v141, %v139
    %v143 = vclz %v142
    %v144 = vsub.s32 %v143, 2
    %vm145 = vcmp.gt.s32.totalorder 0, %v144
    %v146 = vsel %vm145, 0, %v144
    %v147 = vsub.s32 32, %v146
    %v148 = vshll.u32 %v139, %v146
    %v149 = vshrl.u32 %v131, %v147
    %v150 = vor.u32 %v148, %v149
    %v151 = vsub.s32 4294967266, %v146
    %v152 = vadd.s32 %v151, 127
    %v153 = vshll.u32 %v152, 23
    %v154 = vor.u32 4788187, %v153
    %v155 = vand.u32 2147483647, %v154
    %v157 = vcvt.s32.f32 %v150
    %v158 = vmul.f32 %v157, %v155
    %v159 = vxor.u32 %v158, 2147483648
    %v160 = vsel %vm77, %v159, %v158
    %v161 = vsub.s32 4, %v137
    %v162 = vsel %vm77, %v161, %v137
    %v163 = vsel %vm76, %v73, %v160
    %v164 = vsel %vm76, 0, %v162
    %v165 = vcosq.f32.pop %v163
    %v166 = vsinq.f32.pop %v163
    %vm167 = vweird.f32 %v73
    %v168 = vadd.s32 %v164, 3
    %v169 = vand.u32 %v168, 3
    %vm170 = vcmp.lt.s32.totalorder %v169, 2
    %vm171 = vcmp.eq.s32.totalorder %v169, 0
    %v172 = vxor.u32 %v166, 2147483648
    %v173 = vsel %vm171, %v165, %v172
    %vm174 = vcmp.eq.s32.totalorder %v169, 2
    %v175 = vxor.u32 %v165, 2147483648
    %v176 = vsel %vm174, %v175, %v166
    %v177 = vsel %vm170, %v173, %v176
    %v178 = vsel %vm167, nan, %v177
    %v179 = vand.u32 2147483647, %v74
    %vm180 = vcmp.le.f32.partialorder %v179, 0.7853982
    %vm181 = vcmp.lt.s32.totalorder %v74, 0
    %v182 = vand.u32 %v74, 2139095040
    %v183 = vshrl.u32 %v182, 23
    %v184 = vsub.s32 %v183, 127
    %v185 = vand.u32 2147483647, %v74
    %v186 = vand.u32 %v185, 8388607
    %v187 = vor.u32 %v186, 8388608
    %v188 = vsub.s32 0, %v187
    %v189 = vadd.s32 %v184, 1
    %vm190 = vcmp.gt.s32.totalorder %v189, 0
    %v191 = vsel %vm190, %v189, 0
    %v192 = vshrl.u32 %v191, 5
    %v193 = vand.u32 %v191, 31
    %v194 = vsub.s32 32, %v193
    %v195 = vshrl.u32 683565275, %v194
    %v196 = vshll.u32 683565275, %v193
    %v197 = vshrl.u32 2475754826, %v194
    %v198 = vor.u32 %v196, %v197
    %v199 = vshll.u32 2475754826, %v193
    %v200 = vshrl.u32 2131351028, %v194
    %v201 = vor.u32 %v199, %v200
    %v202 = vshll.u32 2131351028, %v193
    %v203 = vshrl.u32 2102212464, %v194
    %v204 = vor.u32 %v202, %v203
    %v205 = vshll.u32 2102212464, %v193
    %v206 = vshrl.u32 920167782, %v194
    %v207 = vor.u32 %v205, %v206
    %v208 = vshll.u32 920167782, %v193
    %v209 = vshrl.u32 1326507024, %v194
    %v210 = vor.u32 %v208, %v209
    %vm211 = vcmp.lt.s32.totalorder %v192, 1
    %vm212 = vcmp.lt.s32.totalorder %v192, 2
    %vm213 = vcmp.lt.s32.totalorder %v192, 3
    %vm214 = vcmp.lt.s32.totalorder %v192, 4
    %v215 = vsel %vm211, %v195, %v198
    %v216 = vsel %vm214, %v204, 2102212464
    %v217 = vsel %vm213, %v201, %v216
    %v218 = vsel %vm212, %v215, %v217
    %v219 = vsel %vm211, %v198, %v201
    %v220 = vsel %vm214, %v207, 920167782
    %v221 = vsel %vm213, %v204, %v220
    %v222 = vsel %vm212, %v219, %v221
    %v223 = vsel %vm211, %v201, %v204
    %v224 = vsel %vm214, %v210, 1326507024
    %v225 = vsel %vm213, %v207, %v224
    %v226 = vsel %vm212, %v223, %v225
    %v227 = vshll.u32 %v187, 8
    %v228 = vmul.u32.u64.compose %v227, %v226
    %v229 = vextract.low.u32 %v228
    %v230 = vextract.high.u32 %v228
    %v231 = vmul.u32.u64.compose %v227, %v222
    %v232 = vextract.low.u32 %v231
    %v233 = vextract.high.u32 %v231
    %v234 = vmul.u32 %v227, %v218
    %v235 = vadd.s32 %v230, %v232
    %vm236 = vc.u32 %v230, %v232
    %v237 = vadd.s32 %v233, 1
    %v238 = vsel %vm236, %v237, %v233
    %v239 = vadd.s32 %v234, %v238
    %v240 = vadd.s32 %v239, 536870912
    %v241 = vshrl.u32 %v240, 30
    %v242 = vshll.u32 %v241, 30
    %v243 = vsub.s32 %v239, %v242
    %vm244 = vcmp.lt.s32.totalorder %v243, 0
    %v245 = vsub.s32 0, %v243
    %v246 = vsel %vm244, %v245, %v243
    %v247 = vclz %v246
    %v248 = vsub.s32 %v247, 2
    %vm249 = vcmp.gt.s32.totalorder 0, %v248
    %v250 = vsel %vm249, 0, %v248
    %v251 = vsub.s32 32, %v250
    %v252 = vshll.u32 %v243, %v250
    %v253 = vshrl.u32 %v235, %v251
    %v254 = vor.u32 %v252, %v253
    %v255 = vsub.s32 4294967266, %v250
    %v256 = vadd.s32 %v255, 127
    %v257 = vshll.u32 %v256, 23
    %v258 = vor.u32 4788187, %v257
    %v259 = vand.u32 2147483647, %v258
    %v261 = vcvt.s32.f32 %v254
    %v262 = vmul.f32 %v261, %v259
    %v263 = vxor.u32 %v262, 2147483648
    %v264 = vsel %vm181, %v263, %v262
    %v265 = vsub.s32 4, %v241
    %v266 = vsel %vm181, %v265, %v241
    %v267 = vsel %vm180, %v74, %v264
    %v268 = vsel %vm180, 0, %v266
    %v269 = vcosq.f32.pop %v267
    %v270 = vsinq.f32.pop %v267
    %vm271 = vweird.f32 %v74
    %v272 = vadd.s32 %v268, 3
    %v273 = vand.u32 %v272, 3
    %vm274 = vcmp.lt.s32.totalorder %v273, 2
    %vm275 = vcmp.eq.s32.totalorder %v273, 0
    %v276 = vxor.u32 %v270, 2147483648
    %v277 = vsel %vm275, %v269, %v276
    %vm278 = vcmp.eq.s32.totalorder %v273, 2
    %v279 = vxor.u32 %v269, 2147483648
    %v280 = vsel %vm278, %v279, %v270
    %v281 = vsel %vm274, %v277, %v280
    %v282 = vsel %vm271, nan, %v281
    %v283 = vld [vmem:[#allocation5] sm:$0xff]
    %v284 = vld [vmem:[#allocation5 + $0x8] sm:$0xff]
    %v285 = vadd.f32 %v178, %v283
    %v286 = vadd.f32 %v282, %v284
    %v287 = vld [vmem:[#allocation7] sm:$0xff]
    %v288 = vld [vmem:[#allocation7 + $0x8] sm:$0xff]
    %v289 = vadd.f32 %v285, %v287
    %v290 = vadd.f32 %v286, %v288
    %v291 = vld [vmem:[#allocation8] sm:$0xff]
    %v292 = vld [vmem:[#allocation8 + $0x8] sm:$0xff]
    %v293 = vsub.f32 %v289, %v291
    %v294 = vsub.f32 %v290, %v292
    %295 = vst [vmem:[#allocation10] sm:$0xff] %v293
    %296 = vst [vmem:[#allocation10 + $0x8] sm:$0xff] %v294
    // Predicated region
    $region34: #{tpu_custom_call.1} parent=1 // pred_check
      _
    $region35: #{tpu_custom_call.1} parent=1 // pred_check_branch
      %298 = sbr.rel (0) target = $region37
    $region36: #{tpu_custom_call.1} parent=1 // pred_region
      %s300 = ssub.s32 256, 256
      %301 = vsyncadd [#allocation4], %s300
      %s302 = sshll.u32 [#allocation10], 4
      %s303 = int_to_ptr.vmem [resolvable:$true] %s302
      %308 = dma.vmem_to_hbm [thread:$0]  %s303, 256, %s4, [#allocation4], 128, 128, 8
    $region37: #{tpu_custom_call.1} parent=1 // pred_fallthru
      _
    // Predicated region
    $region38: #{tpu_custom_call.1} parent=1 // pred_check
      _
    $region39: #{tpu_custom_call.1} parent=1 // pred_check_branch
      %310 = sbr.rel (0) target = $region41
    $region40: #{tpu_custom_call.1} parent=1 // pred_region
      %311 = dma.done [#allocation4], 256
    $region41: #{tpu_custom_call.1} parent=1 // pred_fallthru
      _
    %312 = vsyncpa [#allocation3], 1
    %313 = vsyncpa [#allocation6], 1
    %314 = vsyncpa [#allocation9], 1
    %315 = vsyncpa [#allocation4], 1

</llo_original>
